<compile_context>
chip_gen: v5e
topology: v5e:2x2
jax: 0.10.0
libtpu: 0.0.40
codegen_flags: <defaults>
</compile_context>

<pallas_src>
import functools

import jax
import jax.numpy as jnp
from jax.experimental import pallas as pl
from jax.experimental.pallas import tpu as pltpu

BN_EPS = 1e-3
VOXEL_TILE = 128  # voxel ids handled per inner tile (lane dim of the mask)
_VMEM_LIMIT = 48 * 1024 * 1024


def _stats_kernel(x_ref, w_ref, sum_ref, ssq_ref):
    """Accumulate per-channel sum(z) and sum(z*z) of z = X @ W over the grid."""
    @pl.when(pl.program_id(0) == 0)
    def _():
        sum_ref[...] = jnp.zeros_like(sum_ref)
        ssq_ref[...] = jnp.zeros_like(ssq_ref)

    z = jnp.dot(x_ref[...], w_ref[...], preferred_element_type=jnp.float32)
    sum_ref[...] += jnp.sum(z, axis=0, keepdims=True)
    ssq_ref[...] += jnp.sum(z * z, axis=0, keepdims=True)


def _scatter_max_kernel(x_ref, w_ref, scale_ref, shift_ref, inv_ref, xmax_ref,
                        *, num_voxels):
    """x = relu(scale*(X@W)+shift); max-combine into resident (V,C) xmax."""
    @pl.when(pl.program_id(0) == 0)
    def _():
        xmax_ref[...] = jnp.zeros_like(xmax_ref)

    z = jnp.dot(x_ref[...], w_ref[...], preferred_element_type=jnp.float32)
    x = jnp.maximum(z * scale_ref[...] + shift_ref[...], 0.0)       # (nblk, C) f32
    inv = inv_ref[...]                                              # (nblk, 1) i32
    nblk = x.shape[0]

    # Vectorized masked max per voxel tile (identity 0 since x >= 0).
    for v0 in range(0, num_voxels, VOXEL_TILE):
        vt = min(VOXEL_TILE, num_voxels - v0)
        vids = v0 + jax.lax.broadcasted_iota(jnp.int32, (nblk, vt), 1)
        mask = inv == vids                                          # (nblk, vt)
        part = jnp.max(jnp.where(mask[:, :, None], x[:, None, :], 0.0),
                       axis=0)                                      # (vt, C)
        xmax_ref[v0:v0 + vt, :] = jnp.maximum(xmax_ref[v0:v0 + vt, :], part)


def _gather_concat_kernel(x_ref, w_ref, scale_ref, shift_ref, inv_ref, xmax_ref,
                          x_out_ref, gat_out_ref, *, num_voxels):
    """Recompute x, gather x_max[inv] via one-hot MXU; two lane-aligned outputs."""
    z = jnp.dot(x_ref[...], w_ref[...], preferred_element_type=jnp.float32)
    x = jnp.maximum(z * scale_ref[...] + shift_ref[...], 0.0)
    x_out_ref[...] = x.astype(x_out_ref.dtype)

    inv = inv_ref[...]                                              # (nblk, 1) i32
    nblk, c = x.shape
    gathered = jnp.zeros((nblk, c), jnp.float32)
    for v0 in range(0, num_voxels, VOXEL_TILE):
        vt = min(VOXEL_TILE, num_voxels - v0)
        vids = v0 + jax.lax.broadcasted_iota(jnp.int32, (nblk, vt), 1)
        onehot = (inv == vids).astype(jnp.bfloat16)                 # exact 0/1
        gathered += jnp.dot(onehot, xmax_ref[v0:v0 + vt, :],
                            preferred_element_type=jnp.float32)
    gat_out_ref[...] = gathered.astype(gat_out_ref.dtype)


def pfn_layer_v2(inputs, unq_inv, weight, num_voxels, *, gamma=None, beta=None,
                 bias=None, use_norm=True, last_layer=False, block_n=128,
                 compute_dtype=jnp.bfloat16):
    """inputs: (N, Cin) f32, unq_inv: (N,) int, weight: (Cin, C).
    Returns (V, C) if last_layer else (N, 2*C) — matches PFNLayerV2.forward."""
    n, cin = inputs.shape
    c = int(weight.shape[1])
    v = int(num_voxels)
    n_pad = int(pl.cdiv(n, block_n)) * block_n
    grid = (n_pad // block_n,)

    # Pad points to a block multiple.  Padded rows: X = 0 (contributes exactly 0
    # to the BN sums), inv = V (sentinel -> never matches a voxel id).
    x_p = jnp.zeros((n_pad, cin), compute_dtype).at[:n].set(
        inputs.astype(compute_dtype))
    inv_p = jnp.full((n_pad, 1), v, jnp.int32).at[:n, 0].set(
        unq_inv.astype(jnp.int32))
    w_c = weight.astype(compute_dtype)

    x_spec = pl.BlockSpec((block_n, cin), lambda i: (i, 0))
    w_spec = pl.BlockSpec((cin, c), lambda i: (0, 0))
    vec_spec = pl.BlockSpec((1, c), lambda i: (0, 0))
    inv_spec = pl.BlockSpec((block_n, 1), lambda i: (i, 0))
    xmax_spec = pl.BlockSpec((v, c), lambda i: (0, 0))

    acc_params = pltpu.CompilerParams(dimension_semantics=("arbitrary",),
                                      vmem_limit_bytes=_VMEM_LIMIT)
    par_params = pltpu.CompilerParams(dimension_semantics=("parallel",),
                                      vmem_limit_bytes=_VMEM_LIMIT)

    # ---- pass 1: BN batch statistics (one-pass sum / sum-of-squares) --------
    if use_norm:
        s, ssq = pl.pallas_call(
            _stats_kernel,
            grid=grid,
            in_specs=[x_spec, w_spec],
            out_specs=(vec_spec, vec_spec),
            out_shape=(jax.ShapeDtypeStruct((1, c), jnp.float32),) * 2,
            compiler_params=acc_params,
            cost_estimate=pl.CostEstimate(
                flops=2 * n_pad * cin * c, transcendentals=0,
                bytes_accessed=n_pad * cin * 2 + cin * c * 2 + 8 * c),
        )(x_p, w_c)
        mean = s / n
        var = jnp.maximum(ssq / n - mean * mean, 0.0)
        scale = gamma.reshape(1, c).astype(jnp.float32) * jax.lax.rsqrt(var + BN_EPS)
        shift = beta.reshape(1, c).astype(jnp.float32) - mean * scale
    else:
        scale = jnp.ones((1, c), jnp.float32)
        b = bias if bias is not None else jnp.zeros((c,), jnp.float32)
        shift = b.reshape(1, c).astype(jnp.float32)

    # ---- pass 2: BN+ReLU + scatter-max into resident (V, C) accumulator -----
    x_max = pl.pallas_call(
        functools.partial(_scatter_max_kernel, num_voxels=v),
        grid=grid,
        in_specs=[x_spec, w_spec, vec_spec, vec_spec, inv_spec],
        out_specs=xmax_spec,
        out_shape=jax.ShapeDtypeStruct((v, c), jnp.float32),
        compiler_params=acc_params,
        cost_estimate=pl.CostEstimate(
            flops=2 * n_pad * cin * c + 2 * n_pad * v * c, transcendentals=0,
            bytes_accessed=n_pad * (cin * 2 + 4) + cin * c * 2 + v * c * 4),
    )(x_p, w_c, scale, shift, inv_p)

    if last_layer:
        return x_max

    # ---- pass 3: recompute x, gather x_max[inv]; two lane-aligned outputs ---
    x_out, gathered = pl.pallas_call(
        functools.partial(_gather_concat_kernel, num_voxels=v),
        grid=grid,
        in_specs=[x_spec, w_spec, vec_spec, vec_spec, inv_spec, xmax_spec],
        out_specs=(pl.BlockSpec((block_n, c), lambda i: (i, 0)),
                   pl.BlockSpec((block_n, c), lambda i: (i, 0))),
        out_shape=(jax.ShapeDtypeStruct((n_pad, c), jnp.float32),) * 2,
        compiler_params=par_params,
        cost_estimate=pl.CostEstimate(
            flops=2 * n_pad * cin * c + 2 * n_pad * v * c, transcendentals=0,
            bytes_accessed=n_pad * (cin * 2 + 4 + 8 * c) + cin * c * 2 + v * c * 2),
    )(x_p, w_c, scale, shift, inv_p, x_max.astype(compute_dtype))

    return jnp.concatenate([x_out[:n], gathered[:n]], axis=1)


def _reference(inputs, unq_inv, weight, gamma, beta, bias, num_voxels,
               use_norm=True, last_layer=False):
    x = inputs @ weight
    if use_norm:
        mean = x.mean(axis=0, keepdims=True)
        var = x.var(axis=0, keepdims=True)          # biased -> BN training stats
        x = (x - mean) / jnp.sqrt(var + BN_EPS) * gamma + beta
    else:
        x = x + bias
    x = jnp.maximum(x, 0.0)
    x_max = jax.ops.segment_max(x, unq_inv, num_segments=num_voxels)
    if last_layer:
        return x_max
    return jnp.concatenate([x, x_max[unq_inv, :]], axis=1)


if __name__ == "__main__":
    key = jax.random.PRNGKey(0)
    k_x, k_w1, k_w2, k_g, k_b, k_bias, k_p = jax.random.split(key, 7)

    # small but non-trivial: 500 points, 10 raw features, 64 voxels
    N, C_IN, V = 500, 10, 64
    C_MID = 32    # out_channels=64, not-last layer -> 64 // 2
    C_LAST = 64   # last layer keeps full out_channels

    inputs = jax.random.normal(k_x, (N, C_IN), dtype=jnp.float32)
    # every voxel id in [0, V) appears at least once (as with unique-inverse)
    unq_inv = jax.random.permutation(k_p, jnp.arange(N, dtype=jnp.int32) % V)

    w_mid = jax.random.normal(k_w1, (C_IN, C_MID), dtype=jnp.float32) * 0.1
    g_mid = 1.0 + 0.1 * jax.random.normal(k_g, (C_MID,), dtype=jnp.float32)
    b_mid = 0.1 * jax.random.normal(k_b, (C_MID,), dtype=jnp.float32)

    w_last = jax.random.normal(k_w2, (C_IN, C_LAST), dtype=jnp.float32) * 0.1
    bias_last = 0.1 * jax.random.normal(k_bias, (C_LAST,), dtype=jnp.float32)

    # (a) use_norm, not last, f32 compute -> tight tolerance
    out = jax.block_until_ready(pfn_layer_v2(
        inputs, unq_inv, w_mid, V, gamma=g_mid, beta=b_mid,
        use_norm=True, last_layer=False, compute_dtype=jnp.float32))
    ref = _reference(inputs, unq_inv, w_mid, g_mid, b_mid, None, V, True, False)
    assert out.shape == (N, 2 * C_MID), out.shape
    assert jnp.allclose(out, ref, rtol=2e-3, atol=2e-3), "mismatch (f32, concat)"

    # (b) use_norm, not last, bf16 MXU compute -> looser tolerance
    out = jax.block_until_ready(pfn_layer_v2(
        inputs, unq_inv, w_mid, V, gamma=g_mid, beta=b_mid,
        use_norm=True, last_layer=False, compute_dtype=jnp.bfloat16))
    assert jnp.allclose(out, ref, rtol=5e-2, atol=5e-2), "mismatch (bf16, concat)"

    # (c) use_norm, last layer (returns per-voxel max), f32 compute
    out = jax.block_until_ready(pfn_layer_v2(
        inputs, unq_inv, w_mid, V, gamma=g_mid, beta=b_mid,
        use_norm=True, last_layer=True, compute_dtype=jnp.float32))
    ref = _reference(inputs, unq_inv, w_mid, g_mid, b_mid, None, V, True, True)
    assert out.shape == (V, C_MID), out.shape
    assert jnp.allclose(out, ref, rtol=2e-3, atol=2e-3), "mismatch (f32, x_max)"

    # (d) no norm (Linear has bias), not last, bf16 compute
    out = jax.block_until_ready(pfn_layer_v2(
        inputs, unq_inv, w_last, V, bias=bias_last,
        use_norm=False, last_layer=False, compute_dtype=jnp.bfloat16))
    ref = _reference(inputs, unq_inv, w_last, None, None, bias_last, V, False, False)
    assert out.shape == (N, 2 * C_LAST), out.shape
    assert jnp.allclose(out, ref, rtol=5e-2, atol=5e-2), "mismatch (bf16, no-norm)"

    print("KERNEL_OK")
</pallas_src>

<mosaic_0001>
module attributes {stable_mosaic.version = 11 : i64} {
  func.func @_stats_kernel(%arg0: i32, %arg1: memref<128x10xf32, #tpu.memory_space<vmem>>, %arg2: memref<10x32xf32, #tpu.memory_space<vmem>>, %arg3: memref<1x32xf32, #tpu.memory_space<vmem>>, %arg4: memref<1x32xf32, #tpu.memory_space<vmem>>) attributes {dimension_semantics = [#tpu.dimension_semantics<arbitrary>], iteration_bounds = array<i64: 4>, scalar_prefetch = 0 : i64, scratch_operands = 0 : i64, tpu.core_type = #tpu.core_type<tc>, window_params = [{transform_indices = @transform_0, window_bounds = array<i64: 128, 10>}, {pipeline_mode = #tpu.pipeline_mode<synchronous>, transform_indices = @transform_1, window_bounds = array<i64: 10, 32>}, {pipeline_mode = #tpu.pipeline_mode<synchronous>, transform_indices = @transform_2, window_bounds = array<i64: 1, 32>}, {pipeline_mode = #tpu.pipeline_mode<synchronous>, transform_indices = @transform_3, window_bounds = array<i64: 1, 32>}]} {
    %c0_i32 = arith.constant 0 : i32
    %0 = arith.cmpi eq, %arg0, %c0_i32 : i32
    %1 = arith.extui %0 : i1 to i32
    %c0_i32_0 = arith.constant 0 : i32
    %2 = arith.cmpi ne, %1, %c0_i32_0 : i32
    scf.if %2 {
      %cst_14 = arith.constant 0.000000e+00 : f32
      %17 = vector.broadcast %cst_14 : f32 to vector<1x32xf32>
      %c0_15 = arith.constant 0 : index
      %c0_16 = arith.constant 0 : index
      %18 = vector.load %arg3[%c0_15, %c0_16] : memref<1x32xf32, #tpu.memory_space<vmem>>, vector<1x32xf32>
      tpu.vector_store %arg3[%c0_15, %c0_16], %17 {strides = array<i32>} : memref<1x32xf32, #tpu.memory_space<vmem>>, vector<1x32xf32>,
      %cst_17 = arith.constant 0.000000e+00 : f32
      %19 = vector.broadcast %cst_17 : f32 to vector<1x32xf32>
      %c0_18 = arith.constant 0 : index
      %c0_19 = arith.constant 0 : index
      %20 = vector.load %arg4[%c0_18, %c0_19] : memref<1x32xf32, #tpu.memory_space<vmem>>, vector<1x32xf32>
      tpu.vector_store %arg4[%c0_18, %c0_19], %19 {strides = array<i32>} : memref<1x32xf32, #tpu.memory_space<vmem>>, vector<1x32xf32>,
    } else {
    }
    %c0 = arith.constant 0 : index
    %c0_1 = arith.constant 0 : index
    %3 = vector.load %arg1[%c0, %c0_1] : memref<128x10xf32, #tpu.memory_space<vmem>>, vector<128x10xf32>
    %c0_2 = arith.constant 0 : index
    %c0_3 = arith.constant 0 : index
    %4 = vector.load %arg2[%c0_2, %c0_3] : memref<10x32xf32, #tpu.memory_space<vmem>>, vector<10x32xf32>
    %cst = arith.constant dense<0.000000e+00> : vector<128x32xf32>
    %5 = tpu.matmul %3, %4, %cst {dimension_numbers = #tpu.dot_dimension_numbers<[1], [0], [0], [1], [0, 0, 1, 1], [], []>} : vector<128x10xf32>, vector<10x32xf32>, vector<128x32xf32> -> vector<128x32xf32>
    %c0_4 = arith.constant 0 : index
    %c0_5 = arith.constant 0 : index
    %6 = vector.load %arg3[%c0_4, %c0_5] : memref<1x32xf32, #tpu.memory_space<vmem>>, vector<1x32xf32>
    %cst_6 = arith.constant dense<0.000000e+00> : vector<32xf32>
    %7 = vector.multi_reduction <add>, %5, %cst_6 [0] : vector<128x32xf32> to vector<32xf32>
    %8 = vector.shape_cast %7 : vector<32xf32> to vector<1x32xf32>
    %9 = arith.addf %6, %8 : vector<1x32xf32>
    %c0_7 = arith.constant 0 : index
    %c0_8 = arith.constant 0 : index
    %10 = vector.load %arg3[%c0_7, %c0_8] : memref<1x32xf32, #tpu.memory_space<vmem>>, vector<1x32xf32>
    tpu.vector_store %arg3[%c0_7, %c0_8], %9 {strides = array<i32>} : memref<1x32xf32, #tpu.memory_space<vmem>>, vector<1x32xf32>,
    %c0_9 = arith.constant 0 : index
    %c0_10 = arith.constant 0 : index
    %11 = vector.load %arg4[%c0_9, %c0_10] : memref<1x32xf32, #tpu.memory_space<vmem>>, vector<1x32xf32>
    %12 = arith.mulf %5, %5 : vector<128x32xf32>
    %cst_11 = arith.constant dense<0.000000e+00> : vector<32xf32>
    %13 = vector.multi_reduction <add>, %12, %cst_11 [0] : vector<128x32xf32> to vector<32xf32>
    %14 = vector.shape_cast %13 : vector<32xf32> to vector<1x32xf32>
    %15 = arith.addf %11, %14 : vector<1x32xf32>
    %c0_12 = arith.constant 0 : index
    %c0_13 = arith.constant 0 : index
    %16 = vector.load %arg4[%c0_12, %c0_13] : memref<1x32xf32, #tpu.memory_space<vmem>>, vector<1x32xf32>
    tpu.vector_store %arg4[%c0_12, %c0_13], %15 {strides = array<i32>} : memref<1x32xf32, #tpu.memory_space<vmem>>, vector<1x32xf32>,
    return
  }
  func.func @transform_0(%arg0: i32) -> (i32, i32) {
    %c0_i32 = arith.constant 0 : i32
    %c0_i32_0 = arith.constant 0 : i32
    return %arg0, %c0_i32 : i32, i32
  }
  func.func @transform_1(%arg0: i32) -> (i32, i32) {
    %c0_i32 = arith.constant 0 : i32
    %c0_i32_0 = arith.constant 0 : i32
    %c0_i32_1 = arith.constant 0 : i32
    return %c0_i32, %c0_i32_0 : i32, i32
  }
  func.func @transform_2(%arg0: i32) -> (i32, i32) {
    %c0_i32 = arith.constant 0 : i32
    %c0_i32_0 = arith.constant 0 : i32
    %c0_i32_1 = arith.constant 0 : i32
    return %c0_i32, %c0_i32_0 : i32, i32
  }
  func.func @transform_3(%arg0: i32) -> (i32, i32) {
    %c0_i32 = arith.constant 0 : i32
    %c0_i32_0 = arith.constant 0 : i32
    %c0_i32_1 = arith.constant 0 : i32
    return %c0_i32, %c0_i32_0 : i32, i32
  }
}

</mosaic_0001>

<llo_original>
// kernel: tpu_custom_call.1
$region0: #{tpu_custom_call.1}
  #allocation0 [shape = 'u32[]', space=smem, size = 0x4, offset = 0x4, fixed_abs, tag = 'smem constant byte address 0x4 - core index']
  #allocation1 [shape = 'u32[72,128]{1,0:T(1,128)}', space=vmem, size = 0x9000, scoped, tag = 'internal scratch']
  %s0 = inlined_call_operand.vmem [shape: f32[512,10], index: 0, kind: input, shape index: {}]
  %s1 = inlined_call_operand.vmem [shape: f32[10,32], index: 1, kind: input, shape index: {}]
  %s2 = inlined_call_operand.hbm [shape: f32[1,32], index: 2, kind: output, shape index: {0}]
  %s3 = inlined_call_operand.hbm [shape: f32[1,32], index: 3, kind: output, shape index: {1}]
  %4 = xla_tuple %s2, %s3
  %s5 = sld [smem:[#allocation0]]
  $region53: #{tpu_custom_call.1} parent=0
    _
  %s7 = ssub.s32 1, %s5
  %s8 = scalar_select 0, %s7, %s5
  $region1: #{tpu_custom_call.1} parent=0
    #allocation2 [shape = 'u8[512]{0}', space=vmem, size = 0x400, scoped, tag = 'output window, operand 0, single buffered']
    #allocation3 [shape = 's32[2]{0}', space=sflag, size = 0x8, scoped, tag = 'scoped memory for tpu_custom_call.1']
    #allocation4 [shape = 'u8[512]{0}', space=vmem, size = 0x400, scoped, tag = 'output window, operand 1, single buffered']
    #allocation5 [shape = 's32[1]{0}', space=sflag, size = 0x4, scoped, tag = 'scoped memory for tpu_custom_call.1']
    %9 = vsyncpa [#allocation3], 0
    %10 = vsyncpa [#allocation5], 0
    loop: start=0, step=1, limit=6
    $region2: #{tpu_custom_call.1} parent=1 // loop_pre_header
      _
    $region3: #{tpu_custom_call.1} parent=1 // loop_header
      %s12 = sphi 0, %s16
      %p13 = scmp.ge.s32.totalorder %s12, 6
      %s22 = sphi 0, %s24
      %s25 = sphi 0, %s22
      %s26 = sphi 0, %s25
      %s42 = sphi 0, %s26
      %s46 = sphi 0, %s46
      %s48 = sphi 0, %s46
      %s49 = sphi 0, %s48
      %s63 = sphi 0, %s49
      %s67 = sphi 0, %s67
      %s69 = sphi 0, %s67
      %s70 = sphi 0, %s69
      %s84 = sphi 0, %s70
      %s88 = sphi 0, %s88
      %s90 = sphi 0, %s88
      %s91 = sphi 0, %s90
      %s105 = sphi 0, %s91
    $region4: #{tpu_custom_call.1} parent=1 // loop_header_branch
      %15 = sbr.rel (%p13) target = $region8
    $region5: #{tpu_custom_call.1} parent=1 // loop_body
      %s17 = ssub.s32 %s12, 1
      %s18 = ssub.s32 %s12, 2
      %s19 = sadd.s32 %s12, 1
      %s20 = ssub.s32 %s12, %s19
      %p21 = scmp.eq.s32.totalorder %s20, 0
      %s23 = sadd.s32 %s22, 1
      %s24 = scalar_select %p21, %s22, %s23
      %p27 = pneg %p21
      %p28 = scmp.eq.s32.totalorder %s12, 3
      %p29 = por %p27, %p28
      %p30 = scmp.ne.s32.totalorder %s22, %s25
      %p31 = scmp.eq.s32.totalorder %s12, 0
      %p32 = por %p30, %p31
      %p33 = scmp.ne.s32.totalorder %s22, %s25
      %p34 = scmp.eq.s32.totalorder %s17, 3
      %p35 = por %p33, %p34
      %p36 = scmp.ne.s32.totalorder %s25, %s26
      %p37 = scmp.eq.s32.totalorder %s17, 0
      %p38 = por %p36, %p37
      %p39 = scmp.ne.s32.totalorder %s25, %s26
      %p40 = scmp.eq.s32.totalorder %s18, 3
      %p41 = por %p39, %p40
      %p43 = scmp.ne.s32.totalorder %s26, %s42
      %p44 = scmp.eq.s32.totalorder %s18, 0
      %p45 = por %p43, %p44
      %s47 = sadd.s32 %s46, 1
      %p50 = scmp.eq.s32.totalorder %s12, 3
      %p51 = scmp.ne.s32.totalorder %s46, %s48
      %p52 = scmp.eq.s32.totalorder %s12, 0
      %p53 = por %p51, %p52
      %p54 = scmp.ne.s32.totalorder %s46, %s48
      %p55 = scmp.eq.s32.totalorder %s17, 3
      %p56 = por %p54, %p55
      %p57 = scmp.ne.s32.totalorder %s48, %s49
      %p58 = scmp.eq.s32.totalorder %s17, 0
      %p59 = por %p57, %p58
      %p60 = scmp.ne.s32.totalorder %s48, %s49
      %p61 = scmp.eq.s32.totalorder %s18, 3
      %p62 = por %p60, %p61
      %p64 = scmp.ne.s32.totalorder %s49, %s63
      %p65 = scmp.eq.s32.totalorder %s18, 0
      %p66 = por %p64, %p65
      %s68 = sadd.s32 %s67, 1
      %p71 = scmp.eq.s32.totalorder %s12, 3
      %p72 = scmp.ne.s32.totalorder %s67, %s69
      %p73 = scmp.eq.s32.totalorder %s12, 0
      %p74 = por %p72, %p73
      %p75 = scmp.ne.s32.totalorder %s67, %s69
      %p76 = scmp.eq.s32.totalorder %s17, 3
      %p77 = por %p75, %p76
      %p78 = scmp.ne.s32.totalorder %s69, %s70
      %p79 = scmp.eq.s32.totalorder %s17, 0
      %p80 = por %p78, %p79
      %p81 = scmp.ne.s32.totalorder %s69, %s70
      %p82 = scmp.eq.s32.totalorder %s18, 3
      %p83 = por %p81, %p82
      %p85 = scmp.ne.s32.totalorder %s70, %s84
      %p86 = scmp.eq.s32.totalorder %s18, 0
      %p87 = por %p85, %p86
      %s89 = sadd.s32 %s88, 1
      %p92 = scmp.eq.s32.totalorder %s12, 3
      %p93 = scmp.ne.s32.totalorder %s88, %s90
      %p94 = scmp.eq.s32.totalorder %s12, 0
      %p95 = por %p93, %p94
      %p96 = scmp.ne.s32.totalorder %s88, %s90
      %p97 = scmp.eq.s32.totalorder %s17, 3
      %p98 = por %p96, %p97
      %p99 = scmp.ne.s32.totalorder %s90, %s91
      %p100 = scmp.eq.s32.totalorder %s17, 0
      %p101 = por %p99, %p100
      %p102 = scmp.ne.s32.totalorder %s90, %s91
      %p103 = scmp.eq.s32.totalorder %s18, 3
      %p104 = por %p102, %p103
      %p106 = scmp.ne.s32.totalorder %s91, %s105
      %p107 = scmp.eq.s32.totalorder %s18, 0
      %p108 = por %p106, %p107
      %p109 = scmp.le.s32.totalorder 1, %s12
      %p110 = scmp.lt.s32.totalorder %s12, 5
      %p111 = pnand %p109, %p110
      %p112 = pneg %p111
      // Predicated region
      $region9: #{tpu_custom_call.1} parent=5 // pred_check
        _
      $region10: #{tpu_custom_call.1} parent=5 // pred_check_branch
        %114 = sbr.rel (%p111) target = $region12
      $region11: #{tpu_custom_call.1} parent=5 // pred_region
        %s115 = ssub.s32 %s12, 1
        // Predicated region
        $region13: #{tpu_custom_call.1} parent=11 // pred_check
          %p116 = pneg %p59
        $region14: #{tpu_custom_call.1} parent=11 // pred_check_branch
          %118 = sbr.rel (%p116) target = $region16
        $region15: #{tpu_custom_call.1} parent=11 // pred_region
          _
        $region16: #{tpu_custom_call.1} parent=11 // pred_fallthru
          _
      $region12: #{tpu_custom_call.1} parent=5 // pred_fallthru
        _
      %p119 = scmp.lt.s32.totalorder %s12, 4
      // Predicated region
      $region17: #{tpu_custom_call.1} parent=5 // pred_check
        %p120 = pneg %p119
      $region18: #{tpu_custom_call.1} parent=5 // pred_check_branch
        %122 = sbr.rel (%p120) target = $region20
      $region19: #{tpu_custom_call.1} parent=5 // pred_region
        // Predicated region
        $region21: #{tpu_custom_call.1} parent=19 // pred_check
          %p123 = pneg %p32
        $region22: #{tpu_custom_call.1} parent=19 // pred_check_branch
          %125 = sbr.rel (%p123) target = $region24
        $region23: #{tpu_custom_call.1} parent=19 // pred_region
          %s126 = smul.u32 16, %s12
          %p127 = scmp.lt.s32.totalorder %s126, 63
          %s128 = scalar_select %p127, %s126, 63
          %s129 = smul.addr %s128, 8
          %s130 = scalar_lea.vmem %s0, %s129
          %s131 = smul.u32 16, %s12
        $region24: #{tpu_custom_call.1} parent=19 // pred_fallthru
          _
      $region20: #{tpu_custom_call.1} parent=5 // pred_fallthru
        _
      %p132 = scmp.le.s32.totalorder 1, %s12
      %p133 = scmp.lt.s32.totalorder %s12, 5
      %p134 = pnand %p132, %p133
      %p135 = pneg %p134
      // Predicated region
      $region25: #{tpu_custom_call.1} parent=5 // pred_check
        _
      $region26: #{tpu_custom_call.1} parent=5 // pred_check_branch
        %137 = sbr.rel (%p134) target = $region28
      $region27: #{tpu_custom_call.1} parent=5 // pred_region
        %s138 = ssub.s32 %s12, 1
        %s139 = smul.u32 16, %s17
        %p140 = scmp.lt.s32.totalorder %s139, 63
        %s141 = scalar_select %p140, %s139, 63
        %s142 = smul.addr %s141, 8
        %s143 = scalar_lea.vmem %s0, %s142
        %p144 = pneg %p38
        %p145 = pneg %p35
        %p146 = pneg %p59
        %p147 = pneg %p56
        %p148 = pneg %p80
        %p149 = pneg %p77
        %p150 = pneg %p101
        %p151 = pneg %p98
        %s152 = smul.u32 16, %s17
        %p153 = scmp.lt.s32.totalorder %s152, 63
        %s154 = scalar_select %p153, %s152, 63
        %s155 = smul.addr %s154, 8
        %s156 = scalar_lea.vmem %s0, %s155
        %s157 = smul.u32 16, %s17
        %p158 = scmp.eq.s32.totalorder %s17, 0
        // Predicated region
        $region29: #{tpu_custom_call.1} parent=27 // pred_check
          %p159 = pneg %p158
        $region30: #{tpu_custom_call.1} parent=27 // pred_check_branch
          %161 = sbr.rel (%p159) target = $region32
        $region31: #{tpu_custom_call.1} parent=27 // pred_region
          %vm162 = vcmask 253952
          %163 = vst.msk [vmem:[#allocation2] sm:$0x1] %vm162, 0.0
          %164 = vst.msk [vmem:[#allocation4] sm:$0x1] %vm162, 0.0
        $region32: #{tpu_custom_call.1} parent=27 // pred_fallthru
          _
        %v165 = vld [vmem:[%s156] sm:$0xff]
        %v166 = vld [vmem:[%s156 + $0x8] sm:$0xff]
        %v167 = vld [vmem:[%s156 + $0x10] sm:$0xff]
        %v168 = vld [vmem:[%s156 + $0x18] sm:$0xff]
        %v169 = vld [vmem:[%s156 + $0x20] sm:$0xff]
        %v170 = vld [vmem:[%s156 + $0x28] sm:$0xff]
        %v171 = vld [vmem:[%s156 + $0x30] sm:$0xff]
        %v172 = vld [vmem:[%s156 + $0x38] sm:$0xff]
        %v173 = vld [vmem:[%s156 + $0x40] sm:$0xff]
        %v174 = vld [vmem:[%s156 + $0x48] sm:$0xff]
        %v175 = vld [vmem:[%s156 + $0x50] sm:$0xff]
        %v176 = vld [vmem:[%s156 + $0x58] sm:$0xff]
        %v177 = vld [vmem:[%s156 + $0x60] sm:$0xff]
        %v178 = vld [vmem:[%s156 + $0x68] sm:$0xff]
        %v179 = vld [vmem:[%s156 + $0x70] sm:$0xff]
        %v180 = vld [vmem:[%s156 + $0x78] sm:$0xff]
        %v181 = vld [vmem:[%s1] sm:$0xff]
        %v182 = vld [vmem:[%s1 + $0x8] sm:$0x3]
        %vm183 = vcmask 80896
        %v185 = vsel %vm183, %v165, 0
        %v188 = vsel %vm183, %v166, 0
        %v191 = vsel %vm183, %v167, 0
        %v194 = vsel %vm183, %v168, 0
        %v197 = vsel %vm183, %v169, 0
        %v200 = vsel %vm183, %v170, 0
        %v203 = vsel %vm183, %v171, 0
        %v206 = vsel %vm183, %v172, 0
        %v209 = vsel %vm183, %v173, 0
        %v212 = vsel %vm183, %v174, 0
        %v215 = vsel %vm183, %v175, 0
        %v218 = vsel %vm183, %v176, 0
        %v221 = vsel %vm183, %v177, 0
        %v224 = vsel %vm183, %v178, 0
        %v227 = vsel %vm183, %v179, 0
        %v230 = vsel %vm183, %v180, 0
        %vm232 = vcmask 1041408
        %v234 = vsel %vm232, %v182, 0
        %236 = vmatpush.msra.mxu0 0.0
        %237 = vmatpush.msra.mxu0 0.0
        %238 = vmatpush.msra.mxu0 0.0
        %239 = vmatpush.msra.mxu0 0.0
        %240 = vmatpush.msra.mxu0 0.0
        %241 = vmatpush.msra.mxu0 0.0
        %242 = vmatpush.msra.mxu0 0.0
        %243 = vmatpush.msra.mxu0 0.0
        %244 = vmatpush.msra.mxu0 0.0
        %245 = vmatpush.msra.mxu0 0.0
        %246 = vmatpush.msra.mxu0 0.0
        %247 = vmatpush.msra.mxu0 0.0
        %248 = vmatpush.msra.mxu0 0.0
        %249 = vmatpush.msra.mxu0 0.0
        %250 = vmatpush.msra.mxu0 %v234
        %251 = vmatpush.msra.mxu0 %v181
        %252 = vmatmul.f32.gmra.mxu0 %v185
        %v253 = vpop.f32.mrf.mxu0
        %v254 = vadd.f32 0.0, %v253
        %255 = vmatmul.f32.gmra.mxu0 %v188
        %v256 = vpop.f32.mrf.mxu0
        %v257 = vadd.f32 0.0, %v256
        %258 = vmatmul.f32.gmra.mxu0 %v191
        %v259 = vpop.f32.mrf.mxu0
        %v260 = vadd.f32 0.0, %v259
        %261 = vmatmul.f32.gmra.mxu0 %v194
        %v262 = vpop.f32.mrf.mxu0
        %v263 = vadd.f32 0.0, %v262
        %264 = vmatmul.f32.gmra.mxu0 %v197
        %v265 = vpop.f32.mrf.mxu0
        %v266 = vadd.f32 0.0, %v265
        %267 = vmatmul.f32.gmra.mxu0 %v200
        %v268 = vpop.f32.mrf.mxu0
        %v269 = vadd.f32 0.0, %v268
        %270 = vmatmul.f32.gmra.mxu0 %v203
        %v271 = vpop.f32.mrf.mxu0
        %v272 = vadd.f32 0.0, %v271
        %273 = vmatmul.f32.gmra.mxu0 %v206
        %v274 = vpop.f32.mrf.mxu0
        %v275 = vadd.f32 0.0, %v274
        %276 = vmatmul.f32.gmra.mxu0 %v209
        %v277 = vpop.f32.mrf.mxu0
        %v278 = vadd.f32 0.0, %v277
        %279 = vmatmul.f32.gmra.mxu0 %v212
        %v280 = vpop.f32.mrf.mxu0
        %v281 = vadd.f32 0.0, %v280
        %282 = vmatmul.f32.gmra.mxu0 %v215
        %v283 = vpop.f32.mrf.mxu0
        %v284 = vadd.f32 0.0, %v283
        %285 = vmatmul.f32.gmra.mxu0 %v218
        %v286 = vpop.f32.mrf.mxu0
        %v287 = vadd.f32 0.0, %v286
        %288 = vmatmul.f32.gmra.mxu0 %v221
        %v289 = vpop.f32.mrf.mxu0
        %v290 = vadd.f32 0.0, %v289
        %291 = vmatmul.f32.gmra.mxu0 %v224
        %v292 = vpop.f32.mrf.mxu0
        %v293 = vadd.f32 0.0, %v292
        %294 = vmatmul.f32.gmra.mxu0 %v227
        %v295 = vpop.f32.mrf.mxu0
        %v296 = vadd.f32 0.0, %v295
        %297 = vmatmul.f32.gmra.mxu0 %v230
        %v298 = vpop.f32.mrf.mxu0
        %v299 = vadd.f32 0.0, %v298
        %300 = vdwg.mxu0
        %v301 = vld [vmem:[#allocation2] sm:$0x1]
        %vm302 = vcmask 261120
        %v303 = vsel %vm302, %v254, 0.0
        %v304 = vsel %vm302, %v257, 0.0
        %v305 = vadd.f32 %v303, %v304
        %v306 = vsel %vm302, %v260, 0.0
        %v307 = vadd.f32 %v305, %v306
        %v308 = vsel %vm302, %v263, 0.0
        %v309 = vadd.f32 %v307, %v308
        %v310 = vsel %vm302, %v266, 0.0
        %v311 = vadd.f32 %v309, %v310
        %v312 = vsel %vm302, %v269, 0.0
        %v313 = vadd.f32 %v311, %v312
        %v314 = vsel %vm302, %v272, 0.0
        %v315 = vadd.f32 %v313, %v314
        %v316 = vsel %vm302, %v275, 0.0
        %v317 = vadd.f32 %v315, %v316
        %v318 = vsel %vm302, %v278, 0.0
        %v319 = vadd.f32 %v317, %v318
        %v320 = vsel %vm302, %v281, 0.0
        %v321 = vadd.f32 %v319, %v320
        %v322 = vsel %vm302, %v284, 0.0
        %v323 = vadd.f32 %v321, %v322
        %v324 = vsel %vm302, %v287, 0.0
        %v325 = vadd.f32 %v323, %v324
        %v326 = vsel %vm302, %v290, 0.0
        %v327 = vadd.f32 %v325, %v326
        %v328 = vsel %vm302, %v293, 0.0
        %v329 = vadd.f32 %v327, %v328
        %v330 = vsel %vm302, %v296, 0.0
        %v331 = vadd.f32 %v329, %v330
        %v332 = vsel %vm302, %v299, 0.0
        %v333 = vadd.f32 %v331, %v332
        %v334 = vrot.slane %v333, 4
        %v335 = vadd.f32 %v333, %v334
        %v336 = vrot.slane %v335, 2
        %v337 = vadd.f32 %v335, %v336
        %v338 = vrot.slane %v337, 1
        %v339 = vadd.f32 %v337, %v338
        %v340 = vadd.f32 %v301, %v339
        %vm341 = vcmask 253952
        %342 = vst.msk [vmem:[#allocation2] sm:$0x1] %vm341, %v340
        %v343 = vld [vmem:[#allocation4] sm:$0x1]
        %v344 = vmul.f32 %v254, %v254
        %v345 = vmul.f32 %v257, %v257
        %v346 = vmul.f32 %v260, %v260
        %v347 = vmul.f32 %v263, %v263
        %v348 = vmul.f32 %v266, %v266
        %v349 = vmul.f32 %v269, %v269
        %v350 = vmul.f32 %v272, %v272
        %v351 = vmul.f32 %v275, %v275
        %v352 = vmul.f32 %v278, %v278
        %v353 = vmul.f32 %v281, %v281
        %v354 = vmul.f32 %v284, %v284
        %v355 = vmul.f32 %v287, %v287
        %v356 = vmul.f32 %v290, %v290
        %v357 = vmul.f32 %v293, %v293
        %v358 = vmul.f32 %v296, %v296
        %v359 = vmul.f32 %v299, %v299
        %v360 = vsel %vm302, %v344, 0.0
        %v361 = vsel %vm302, %v345, 0.0
        %v362 = vadd.f32 %v360, %v361
        %v363 = vsel %vm302, %v346, 0.0
        %v364 = vadd.f32 %v362, %v363
        %v365 = vsel %vm302, %v347, 0.0
        %v366 = vadd.f32 %v364, %v365
        %v367 = vsel %vm302, %v348, 0.0
        %v368 = vadd.f32 %v366, %v367
        %v369 = vsel %vm302, %v349, 0.0
        %v370 = vadd.f32 %v368, %v369
        %v371 = vsel %vm302, %v350, 0.0
        %v372 = vadd.f32 %v370, %v371
        %v373 = vsel %vm302, %v351, 0.0
        %v374 = vadd.f32 %v372, %v373
        %v375 = vsel %vm302, %v352, 0.0
        %v376 = vadd.f32 %v374, %v375
        %v377 = vsel %vm302, %v353, 0.0
        %v378 = vadd.f32 %v376, %v377
        %v379 = vsel %vm302, %v354, 0.0
        %v380 = vadd.f32 %v378, %v379
        %v381 = vsel %vm302, %v355, 0.0
        %v382 = vadd.f32 %v380, %v381
        %v383 = vsel %vm302, %v356, 0.0
        %v384 = vadd.f32 %v382, %v383
        %v385 = vsel %vm302, %v357, 0.0
        %v386 = vadd.f32 %v384, %v385
        %v387 = vsel %vm302, %v358, 0.0
        %v388 = vadd.f32 %v386, %v387
        %v389 = vsel %vm302, %v359, 0.0
        %v390 = vadd.f32 %v388, %v389
        %v391 = vrot.slane %v390, 4
        %v392 = vadd.f32 %v390, %v391
        %v393 = vrot.slane %v392, 2
        %v394 = vadd.f32 %v392, %v393
        %v395 = vrot.slane %v394, 1
        %v396 = vadd.f32 %v394, %v395
        %v397 = vadd.f32 %v343, %v396
        %398 = vst.msk [vmem:[#allocation4] sm:$0x1] %vm341, %v397
        // Predicated region
        $region33: #{tpu_custom_call.1} parent=27 // pred_check
          %p399 = pneg %p77
        $region34: #{tpu_custom_call.1} parent=27 // pred_check_branch
          %401 = sbr.rel (%p399) target = $region36
        $region35: #{tpu_custom_call.1} parent=27 // pred_region
          %403 = vsyncadd [#allocation3], 0
          %s405 = sshll.u32 [#allocation2], 4
          %s406 = int_to_ptr.vmem [resolvable:$true] %s405
          %s407 = sshll.u32 %s2, 4
          %s408 = int_to_ptr.hbm [resolvable:$true] %s407
          %410 = dma.vmem_to_hbm [thread:$0]  %s406, 16, %s408, [#allocation3]
        $region36: #{tpu_custom_call.1} parent=27 // pred_fallthru
          _
        // Predicated region
        $region37: #{tpu_custom_call.1} parent=27 // pred_check
          %p411 = pneg %p98
        $region38: #{tpu_custom_call.1} parent=27 // pred_check_branch
          %413 = sbr.rel (%p411) target = $region40
        $region39: #{tpu_custom_call.1} parent=27 // pred_region
          %415 = vsyncadd [#allocation5], 0
          %s417 = sshll.u32 [#allocation4], 4
          %s418 = int_to_ptr.vmem [resolvable:$true] %s417
          %s419 = sshll.u32 %s3, 4
          %s420 = int_to_ptr.hbm [resolvable:$true] %s419
          %422 = dma.vmem_to_hbm [thread:$0]  %s418, 16, %s420, [#allocation5]
        $region40: #{tpu_custom_call.1} parent=27 // pred_fallthru
          _
        // Predicated region
        $region41: #{tpu_custom_call.1} parent=27 // pred_check
          %p423 = pneg %p77
        $region42: #{tpu_custom_call.1} parent=27 // pred_check_branch
          %425 = sbr.rel (%p423) target = $region44
        $region43: #{tpu_custom_call.1} parent=27 // pred_region
          %427 = dma.done [#allocation3], 16
        $region44: #{tpu_custom_call.1} parent=27 // pred_fallthru
          _
        // Predicated region
        $region45: #{tpu_custom_call.1} parent=27 // pred_check
          %p428 = pneg %p98
        $region46: #{tpu_custom_call.1} parent=27 // pred_check_branch
          %430 = sbr.rel (%p428) target = $region48
        $region47: #{tpu_custom_call.1} parent=27 // pred_region
          %432 = dma.done [#allocation5], 16
        $region48: #{tpu_custom_call.1} parent=27 // pred_fallthru
          _
      $region28: #{tpu_custom_call.1} parent=5 // pred_fallthru
        _
      %p433 = scmp.le.s32.totalorder 2, %s12
      // Predicated region
      $region49: #{tpu_custom_call.1} parent=5 // pred_check
        %p434 = pneg %p433
      $region50: #{tpu_custom_call.1} parent=5 // pred_check_branch
        %436 = sbr.rel (%p434) target = $region52
      $region51: #{tpu_custom_call.1} parent=5 // pred_region
        %s437 = ssub.s32 %s12, 2
      $region52: #{tpu_custom_call.1} parent=5 // pred_fallthru
        _
    $region6: #{tpu_custom_call.1} parent=1 // loop_footer
      %s16 = sadd.s32 1, %s12
    $region7: #{tpu_custom_call.1} parent=1 // loop_footer_branch
      %11 = sbr.rel target = $region3
    $region8: #{tpu_custom_call.1} parent=1 // loop_exit
      _
    %438 = vsyncpa [#allocation3], 1
    %s439 = scalar_lea.sflag [#allocation3], 1
    %440 = vsyncpa %s439, 1
    %441 = vsyncpa [#allocation5], 1

</llo_original>
